<compile_context>
chip_gen: v6e
topology: v6e:2x2x1
jax: 0.10.0
libtpu: 0.0.40
codegen_flags: <defaults>
</compile_context>

<pallas_src>
import math

import jax
import jax.numpy as jnp
from jax.experimental import pallas as pl
from jax.experimental.pallas import tpu as pltpu


def _round_up(x, m):
    return ((x + m - 1) // m) * m


def _tpu_vmem_bytes():
    """Per-TensorCore VMEM capacity; conservative fallback = v7x (64 MiB)."""
    try:
        return int(pltpu.get_tpu_info().vmem_capacity_bytes)
    except Exception:
        return 64 * 1024 * 1024


def _bspec(shape, index_map, buffers=None):
    """BlockSpec with optional single-buffering for resident operands."""
    if buffers is not None and hasattr(pl, "Buffered"):
        try:
            return pl.BlockSpec(shape, index_map, pipeline_mode=pl.Buffered(buffers))
        except TypeError:
            pass
    return pl.BlockSpec(shape, index_map)


def _pick_hidden_tile(P, D, vmem_cap):
    """Chunk size along pf_dim. Full P (weights resident) when they fit."""
    resident = 2 * D * P * 2 + (P + D) * 4            # bf16 W1+W2 + f32 biases
    if resident <= int(0.35 * vmem_cap):
        return P
    wbuf_budget = vmem_cap // 4                        # double-buffered chunk pair
    best = None
    for tp in (1024, 512, 384, 256, 128):              # lane-aligned divisors
        if P % tp == 0:
            if best is None:
                best = tp
            if 8 * D * tp <= wbuf_budget:              # 2 bufs * 2 mats * bf16
                return tp
    return best if best is not None else P


def _footprint_bytes(tm, D, tp, p_chunks):
    wbuf = 1 if p_chunks == 1 else 2                   # resident vs streamed
    return (2 * tm * D * 4                             # x tiles (f32, double-buf)
            + 2 * tm * D * 4                           # out tiles (f32, double-buf)
            + tm * D * 4                               # f32 accumulator scratch
            + tm * tp * 4                              # hidden chunk intermediate
            + wbuf * (D * tp + tp * D) * 2             # W1/W2 chunk(s), bf16
            + wbuf * tp * 4                            # b1 chunk(s)
            + D * 4)                                   # b2


def _ffn_kernel(x_ref, w1_ref, b1_ref, w2_ref, b2_ref, out_ref, acc_ref):
    """One (row tile, pf_dim chunk) step of y = relu(x @ W1 + b1) @ W2 + b2."""
    j = pl.program_id(1)

    @pl.when(j == 0)
    def _():
        acc_ref[...] = jnp.zeros_like(acc_ref)

    x = x_ref[...].astype(jnp.bfloat16)                          # (tm, D)
    hid = jnp.dot(x, w1_ref[...], preferred_element_type=jnp.float32)
    hid = jnp.maximum(hid + b1_ref[...], 0.0)                    # (tm, tp) f32
    # TODO(synk): nn.Dropout is identity here (eval-mode forward); no RNG masking.
    acc_ref[...] += jnp.dot(hid.astype(jnp.bfloat16), w2_ref[...],
                            preferred_element_type=jnp.float32)  # (tm, D) f32

    @pl.when(j == pl.num_programs(1) - 1)
    def _():
        out_ref[...] = (acc_ref[...] + b2_ref[...]).astype(out_ref.dtype)


def positionwise_ffn(x, w1, b1, w2, b2):
    """Pallas forward of PositionwiseFeedforwardLayer (eval mode).

    x: (..., D) float32;  w1: (D, P), b1: (P,), w2: (P, D), b2: (D,).
    """
    orig_shape = x.shape
    D = orig_shape[-1]
    P = w1.shape[-1]
    M = int(math.prod(orig_shape[:-1]))

    vmem_cap = _tpu_vmem_bytes()
    tm_cap = 1024 if vmem_cap >= 96 * 1024 * 1024 else 512

    tp = _pick_hidden_tile(P, D, vmem_cap)
    p_chunks = P // tp if P % tp == 0 else 1
    if p_chunks == 1:
        tp = P

    # Row tile: as big as the per-TC VMEM budget allows, never split tiny M
    # (the grid is a sequential loop on a single TensorCore).
    budget = int(0.6 * vmem_cap)
    tm = max(8, min(tm_cap, _round_up(M, 8)) // 8 * 8)
    while tm > 8 and _footprint_bytes(tm, D, tp, p_chunks) > budget:
        tm = max(8, (tm // 2) // 8 * 8)

    footprint = _footprint_bytes(tm, D, tp, p_chunks)
    vmem_limit = max(16 * 1024 * 1024,
                     min(int(0.85 * vmem_cap), 2 * footprint + (8 << 20)))

    # x stays f32 (cast fused into the kernel); weights cast once to bf16.
    x2 = x.reshape(M, D)
    w1b = w1.astype(jnp.bfloat16)
    w2b = w2.astype(jnp.bfloat16)
    b1f = b1.reshape(1, P).astype(jnp.float32)
    b2f = b2.reshape(1, D).astype(jnp.float32)

    row_tiles = pl.cdiv(M, tm)
    grid = (row_tiles, p_chunks)

    const_w = 1 if p_chunks == 1 else None   # constant index map -> single buffer
    in_specs = [
        _bspec((tm, D), lambda i, j: (i, 0)),            # x row tile (pipelined)
        _bspec((D, tp), lambda i, j: (0, j), const_w),   # W1 chunk
        _bspec((1, tp), lambda i, j: (0, j), const_w),   # b1 chunk
        _bspec((tp, D), lambda i, j: (j, 0), const_w),   # W2 chunk
        _bspec((1, D), lambda i, j: (0, 0), 1),          # b2 (always resident)
    ]
    out_specs = pl.BlockSpec((tm, D), lambda i, j: (i, 0))

    weight_fetches = 1 if p_chunks == 1 else row_tiles
    cost = pl.CostEstimate(
        flops=4 * M * D * P,                                     # two matmuls
        transcendentals=0,
        bytes_accessed=(M * D * 4                                # x (f32)
                        + weight_fetches * 2 * D * P * 2         # W1 + W2 (bf16)
                        + P * 4 + D * 4                          # biases
                        + M * D * 4))                            # output (f32)

    out = pl.pallas_call(
        _ffn_kernel,
        out_shape=jax.ShapeDtypeStruct((M, D), x.dtype),
        grid=grid,
        in_specs=in_specs,
        out_specs=out_specs,
        scratch_shapes=[pltpu.VMEM((tm, D), jnp.float32)],
        compiler_params=pltpu.CompilerParams(
            dimension_semantics=("parallel", "arbitrary"),
            vmem_limit_bytes=int(vmem_limit)),
        cost_estimate=cost,
    )(x2, w1b, b1f, w2b, b2f)

    return out.reshape(orig_shape)


# ----------------------------------------------------------------------------
# Pure-JAX references for correctness checks.
# ----------------------------------------------------------------------------
def ffn_reference_f32(x, w1, b1, w2, b2):
    hid = jnp.maximum(x @ w1 + b1, 0.0)
    return hid @ w2 + b2


def ffn_reference_bf16(x, w1, b1, w2, b2):
    # Mirrors the kernel numerics: bf16 matmul operands, f32 accumulation.
    hid = jnp.dot(x.astype(jnp.bfloat16), w1.astype(jnp.bfloat16),
                  preferred_element_type=jnp.float32) + b1
    hid = jnp.maximum(hid, 0.0)
    return jnp.dot(hid.astype(jnp.bfloat16), w2.astype(jnp.bfloat16),
                   preferred_element_type=jnp.float32) + b2


if __name__ == "__main__":
    HID_DIM = 32     # hid_dim
    PF_DIM = 64      # pf_dim
    B, S = 2, 8      # batch, seq  -> x is (B, S, HID_DIM) as used in the model

    key = jax.random.PRNGKey(0)
    kx, k1, k2, k3, k4 = jax.random.split(key, 5)

    # nn.Linear-style init: U(-1/sqrt(in), 1/sqrt(in)).
    bound1 = 1.0 / math.sqrt(HID_DIM)
    bound2 = 1.0 / math.sqrt(PF_DIM)
    w1 = jax.random.uniform(k1, (HID_DIM, PF_DIM), jnp.float32, -bound1, bound1)
    b1 = jax.random.uniform(k2, (PF_DIM,), jnp.float32, -bound1, bound1)
    w2 = jax.random.uniform(k3, (PF_DIM, HID_DIM), jnp.float32, -bound2, bound2)
    b2 = jax.random.uniform(k4, (HID_DIM,), jnp.float32, -bound2, bound2)

    x = jax.random.normal(kx, (B, S, HID_DIM), jnp.float32)

    out = positionwise_ffn(x, w1, b1, w2, b2)
    out = jax.block_until_ready(out)
    assert out.shape == (B, S, HID_DIM)

    # Exact-semantics check (same bf16/f32 mixed precision as the kernel).
    ref_bf16 = ffn_reference_bf16(x, w1, b1, w2, b2)
    assert jnp.allclose(out, ref_bf16, atol=1e-3, rtol=1e-3), \
        "mismatch vs bf16-matmul JAX reference"

    # Sanity check vs the full-f32 PyTorch-equivalent forward.
    ref_f32 = ffn_reference_f32(x, w1, b1, w2, b2)
    assert jnp.allclose(out, ref_f32, atol=2e-2, rtol=2e-2), \
        "mismatch vs f32 JAX reference"

    print("KERNEL_OK")
</pallas_src>

<mosaic_0001>
module attributes {stable_mosaic.version = 11 : i64} {
  func.func @_ffn_kernel(%arg0: i32, %arg1: i32, %arg2: memref<16x32xf32, #tpu.memory_space<vmem>>, %arg3: memref<32x64xbf16, #tpu.memory_space<vmem>>, %arg4: memref<1x64xf32, #tpu.memory_space<vmem>>, %arg5: memref<64x32xbf16, #tpu.memory_space<vmem>>, %arg6: memref<1x32xf32, #tpu.memory_space<vmem>>, %arg7: memref<16x32xf32, #tpu.memory_space<vmem>>, %arg8: memref<16x32xf32, #tpu.memory_space<vmem>>) attributes {dimension_semantics = [#tpu.dimension_semantics<parallel>, #tpu.dimension_semantics<arbitrary>], iteration_bounds = array<i64: 1, 1>, scalar_prefetch = 0 : i64, scratch_operands = 1 : i64, tpu.core_type = #tpu.core_type<tc>, window_params = [{transform_indices = @transform_0, window_bounds = array<i64: 16, 32>}, {pipeline_mode = #tpu.pipeline_mode<synchronous>, transform_indices = @transform_1, window_bounds = array<i64: 32, 64>}, {pipeline_mode = #tpu.pipeline_mode<synchronous>, transform_indices = @transform_2, window_bounds = array<i64: 1, 64>}, {pipeline_mode = #tpu.pipeline_mode<synchronous>, transform_indices = @transform_3, window_bounds = array<i64: 64, 32>}, {pipeline_mode = #tpu.pipeline_mode<synchronous>, transform_indices = @transform_4, window_bounds = array<i64: 1, 32>}, {transform_indices = @transform_5, window_bounds = array<i64: 16, 32>}]} {
    %c0_i32 = arith.constant 0 : i32
    %0 = arith.cmpi eq, %arg1, %c0_i32 : i32
    %1 = arith.extui %0 : i1 to i32
    %c0_i32_0 = arith.constant 0 : i32
    %2 = arith.cmpi ne, %1, %c0_i32_0 : i32
    scf.if %2 {
      %cst_16 = arith.constant 0.000000e+00 : f32
      %21 = vector.broadcast %cst_16 : f32 to vector<16x32xf32>
      %c0_17 = arith.constant 0 : index
      %c0_18 = arith.constant 0 : index
      %22 = vector.load %arg8[%c0_17, %c0_18] : memref<16x32xf32, #tpu.memory_space<vmem>>, vector<16x32xf32>
      tpu.vector_store %arg8[%c0_17, %c0_18], %21 {strides = array<i32>} : memref<16x32xf32, #tpu.memory_space<vmem>>, vector<16x32xf32>,
    } else {
    }
    %c0 = arith.constant 0 : index
    %c0_1 = arith.constant 0 : index
    %3 = vector.load %arg2[%c0, %c0_1] : memref<16x32xf32, #tpu.memory_space<vmem>>, vector<16x32xf32>
    %4 = arith.truncf %3 : vector<16x32xf32> to vector<16x32xbf16>
    %c0_2 = arith.constant 0 : index
    %c0_3 = arith.constant 0 : index
    %5 = vector.load %arg3[%c0_2, %c0_3] : memref<32x64xbf16, #tpu.memory_space<vmem>>, vector<32x64xbf16>
    %cst = arith.constant dense<0.000000e+00> : vector<16x64xf32>
    %6 = tpu.matmul %4, %5, %cst {dimension_numbers = #tpu.dot_dimension_numbers<[1], [0], [0], [1], [0, 0, 1, 1], [], []>} : vector<16x32xbf16>, vector<32x64xbf16>, vector<16x64xf32> -> vector<16x64xf32>
    %c0_4 = arith.constant 0 : index
    %c0_5 = arith.constant 0 : index
    %7 = vector.load %arg4[%c0_4, %c0_5] : memref<1x64xf32, #tpu.memory_space<vmem>>, vector<1x64xf32>
    %8 = vector.broadcast %7 : vector<1x64xf32> to vector<16x64xf32>
    %9 = arith.addf %6, %8 : vector<16x64xf32>
    %cst_6 = arith.constant 0.000000e+00 : f32
    %10 = vector.broadcast %cst_6 : f32 to vector<16x64xf32>
    %11 = arith.maximumf %9, %10 : vector<16x64xf32>
    %c0_7 = arith.constant 0 : index
    %c0_8 = arith.constant 0 : index
    %12 = vector.load %arg8[%c0_7, %c0_8] : memref<16x32xf32, #tpu.memory_space<vmem>>, vector<16x32xf32>
    %13 = arith.truncf %11 : vector<16x64xf32> to vector<16x64xbf16>
    %c0_9 = arith.constant 0 : index
    %c0_10 = arith.constant 0 : index
    %14 = vector.load %arg5[%c0_9, %c0_10] : memref<64x32xbf16, #tpu.memory_space<vmem>>, vector<64x32xbf16>
    %cst_11 = arith.constant dense<0.000000e+00> : vector<16x32xf32>
    %15 = tpu.matmul %13, %14, %cst_11 {dimension_numbers = #tpu.dot_dimension_numbers<[1], [0], [0], [1], [0, 0, 1, 1], [], []>} : vector<16x64xbf16>, vector<64x32xbf16>, vector<16x32xf32> -> vector<16x32xf32>
    %16 = arith.addf %12, %15 : vector<16x32xf32>
    %c0_12 = arith.constant 0 : index
    %c0_13 = arith.constant 0 : index
    %17 = vector.load %arg8[%c0_12, %c0_13] : memref<16x32xf32, #tpu.memory_space<vmem>>, vector<16x32xf32>
    tpu.vector_store %arg8[%c0_12, %c0_13], %16 {strides = array<i32>} : memref<16x32xf32, #tpu.memory_space<vmem>>, vector<16x32xf32>,
    %c0_i32_14 = arith.constant 0 : i32
    %18 = arith.cmpi eq, %arg1, %c0_i32_14 : i32
    %19 = arith.extui %18 : i1 to i32
    %c0_i32_15 = arith.constant 0 : i32
    %20 = arith.cmpi ne, %19, %c0_i32_15 : i32
    scf.if %20 {
      %c0_16 = arith.constant 0 : index
      %c0_17 = arith.constant 0 : index
      %21 = vector.load %arg8[%c0_16, %c0_17] : memref<16x32xf32, #tpu.memory_space<vmem>>, vector<16x32xf32>
      %c0_18 = arith.constant 0 : index
      %c0_19 = arith.constant 0 : index
      %22 = vector.load %arg6[%c0_18, %c0_19] : memref<1x32xf32, #tpu.memory_space<vmem>>, vector<1x32xf32>
      %23 = vector.broadcast %22 : vector<1x32xf32> to vector<16x32xf32>
      %24 = arith.addf %21, %23 : vector<16x32xf32>
      %c0_20 = arith.constant 0 : index
      %c0_21 = arith.constant 0 : index
      %25 = vector.load %arg7[%c0_20, %c0_21] : memref<16x32xf32, #tpu.memory_space<vmem>>, vector<16x32xf32>
      tpu.vector_store %arg7[%c0_20, %c0_21], %24 {strides = array<i32>} : memref<16x32xf32, #tpu.memory_space<vmem>>, vector<16x32xf32>,
    } else {
    }
    return
  }
  func.func @transform_0(%arg0: i32, %arg1: i32) -> (i32, i32) {
    %c0_i32 = arith.constant 0 : i32
    %c0_i32_0 = arith.constant 0 : i32
    return %arg0, %c0_i32 : i32, i32
  }
  func.func @transform_1(%arg0: i32, %arg1: i32) -> (i32, i32) {
    %c0_i32 = arith.constant 0 : i32
    %c0_i32_0 = arith.constant 0 : i32
    return %c0_i32, %arg1 : i32, i32
  }
  func.func @transform_2(%arg0: i32, %arg1: i32) -> (i32, i32) {
    %c0_i32 = arith.constant 0 : i32
    %c0_i32_0 = arith.constant 0 : i32
    return %c0_i32, %arg1 : i32, i32
  }
  func.func @transform_3(%arg0: i32, %arg1: i32) -> (i32, i32) {
    %c0_i32 = arith.constant 0 : i32
    %c0_i32_0 = arith.constant 0 : i32
    return %arg1, %c0_i32 : i32, i32
  }
  func.func @transform_4(%arg0: i32, %arg1: i32) -> (i32, i32) {
    %c0_i32 = arith.constant 0 : i32
    %c0_i32_0 = arith.constant 0 : i32
    %c0_i32_1 = arith.constant 0 : i32
    return %c0_i32, %c0_i32_0 : i32, i32
  }
  func.func @transform_5(%arg0: i32, %arg1: i32) -> (i32, i32) {
    %c0_i32 = arith.constant 0 : i32
    %c0_i32_0 = arith.constant 0 : i32
    return %arg0, %c0_i32 : i32, i32
  }
}

</mosaic_0001>

<llo_original>
// kernel: tpu_custom_call.1
$region0: #{tpu_custom_call.1}
  #allocation0 [shape = 'u32[]', space=smem, size = 0x4, offset = 0x4, fixed_abs, tag = 'smem constant byte address 0x4 - core index']
  #allocation1 [shape = 'u32[144,128]{1,0:T(1,128)}', space=vmem, size = 0x12000, scoped, tag = 'internal scratch']
  #allocation2 [shape = 'f32[16,32]{1,0:T(8,128)}', space=vmem, size = 0x2000, scoped, tag = 'scratch operand']
  %s0 = inlined_call_operand.vmem [shape: f32[16,32], index: 0, kind: input, shape index: {}]
  %s1 = inlined_call_operand.vmem [shape: bf16[32,64], index: 1, kind: input, shape index: {}]
  %s2 = inlined_call_operand.vmem [shape: f32[1,64], index: 2, kind: input, shape index: {}]
  %s3 = inlined_call_operand.vmem [shape: bf16[64,32], index: 3, kind: input, shape index: {}]
  %s4 = inlined_call_operand.vmem [shape: f32[1,32], index: 4, kind: input, shape index: {}]
  %s5 = inlined_call_operand.hbm [shape: f32[16,32], index: 5, kind: output, shape index: {}]
  %s6 = sld [smem:[#allocation0]]
  $region38: #{tpu_custom_call.1} parent=0
    _
  %s8 = ssub.s32 1, %s6
  %s9 = scalar_select 0, %s8, %s6
  $region1: #{tpu_custom_call.1} parent=0
    #allocation3 [shape = 'u8[8192]{0}', space=vmem, size = 0x2000, scoped, tag = 'output window, operand 0, single buffered']
    #allocation4 [shape = 's32[1]{0}', space=sflag, size = 0x4, scoped, tag = 'scoped memory for tpu_custom_call.1']
    %10 = vsyncpa [#allocation4], 0
    // Predicated region
    $region2: #{tpu_custom_call.1} parent=1 // pred_check
      _
    $region3: #{tpu_custom_call.1} parent=1 // pred_check_branch
      %12 = sbr.rel (0) target = $region5
    $region4: #{tpu_custom_call.1} parent=1 // pred_region
      _
    $region5: #{tpu_custom_call.1} parent=1 // pred_fallthru
      _
    // Predicated region
    $region6: #{tpu_custom_call.1} parent=1 // pred_check
      _
    $region7: #{tpu_custom_call.1} parent=1 // pred_check_branch
      %14 = sbr.rel (0) target = $region9
    $region8: #{tpu_custom_call.1} parent=1 // pred_region
      _
    $region9: #{tpu_custom_call.1} parent=1 // pred_fallthru
      _
    // Predicated region
    $region10: #{tpu_custom_call.1} parent=1 // pred_check
      _
    $region11: #{tpu_custom_call.1} parent=1 // pred_check_branch
      %16 = sbr.rel (0) target = $region13
    $region12: #{tpu_custom_call.1} parent=1 // pred_region
      _
    $region13: #{tpu_custom_call.1} parent=1 // pred_fallthru
      _
    // Predicated region
    $region14: #{tpu_custom_call.1} parent=1 // pred_check
      _
    $region15: #{tpu_custom_call.1} parent=1 // pred_check_branch
      %18 = sbr.rel (0) target = $region17
    $region16: #{tpu_custom_call.1} parent=1 // pred_region
      _
    $region17: #{tpu_custom_call.1} parent=1 // pred_fallthru
      _
    // Predicated region
    $region18: #{tpu_custom_call.1} parent=1 // pred_check
      _
    $region19: #{tpu_custom_call.1} parent=1 // pred_check_branch
      %20 = sbr.rel (0) target = $region21
    $region20: #{tpu_custom_call.1} parent=1 // pred_region
      _
    $region21: #{tpu_custom_call.1} parent=1 // pred_fallthru
      _
    %p22 = scmp.eq.s32.totalorder 0, 0
    // Predicated region
    $region22: #{tpu_custom_call.1} parent=1 // pred_check
      %p23 = pneg %p22
    $region23: #{tpu_custom_call.1} parent=1 // pred_check_branch
      %25 = sbr.rel (%p23) target = $region25
    $region24: #{tpu_custom_call.1} parent=1 // pred_region
      %vm26 = vcmask 261120
      %27 = vst.msk [vmem:[#allocation2] sm:$0xff] %vm26, 0.0
      %28 = vst.msk [vmem:[#allocation2 + $0x8] sm:$0xff] %vm26, 0.0
    $region25: #{tpu_custom_call.1} parent=1 // pred_fallthru
      _
    %v29 = vld [vmem:[%s0] sm:$0xff]
    %v30 = vld [vmem:[%s0 + $0x8] sm:$0xff]
    %v31 = vpack.c.bf16 %v30, %v29
    %v32 = vld [vmem:[%s1] sm:$0xf]
    %v33 = vld [vmem:[%s1 + $0x4] sm:$0xf]
    %v34 = vld [vmem:[%s1 + $0x8] sm:$0xf]
    %v35 = vld [vmem:[%s1 + $0xc] sm:$0xf]
    %v36 = vld [vmem:[%s2] sm:$0x1]
    %v38 = vlaneseq
    %v39 = vshrl.u32 %v38, 7
    %v40 = vsub.s32 0, %v39
    %v41 = vrot.slane %v36, %v40
    %v47 = vunpack.c.l.b16 %v32
    %v48 = vunpack.c.l.b16 %v33
    %v49 = vunpack.c.l.b16 %v34
    %v50 = vunpack.c.l.b16 %v35
    %v51 = vpack.c.b16 %v48, %v47
    %v52 = vpack.c.b16 %v50, %v49
    %vm55 = vcmask 261120
    %v57 = vsel %vm55, %v31, 0
    %59 = vmatprep.subr.bf16.mxu0 0
    %60 = vmatpush1.bf16.msra.mxu0 0
    %61 = vmatprep.subr.bf16.mxu0 0
    %62 = vmatpush1.bf16.msra.mxu0 0
    %63 = vmatprep.subr.bf16.mxu0 0
    %64 = vmatpush1.bf16.msra.mxu0 0
    %65 = vmatprep.subr.bf16.mxu0 0
    %66 = vmatpush1.bf16.msra.mxu0 0
    %67 = vmatprep.subr.bf16.mxu0 0
    %68 = vmatpush1.bf16.msra.mxu0 0
    %69 = vmatprep.subr.bf16.mxu0 0
    %70 = vmatpush1.bf16.msra.mxu0 0
    %71 = vmatprep.subr.bf16.mxu0 0
    %72 = vmatpush1.bf16.msra.mxu0 %v52
    %73 = vmatprep.subr.bf16.mxu0 0
    %74 = vmatpush1.bf16.msra.mxu0 %v51
    %75 = vmatprep.subr.bf16.mxu0 0
    %76 = vmatpush2.bf16.msra.mxu0 0
    %77 = vmatprep.subr.bf16.mxu0 0
    %78 = vmatpush2.bf16.msra.mxu0 0
    %79 = vmatprep.subr.bf16.mxu0 0
    %80 = vmatpush2.bf16.msra.mxu0 0
    %81 = vmatprep.subr.bf16.mxu0 0
    %82 = vmatpush2.bf16.msra.mxu0 0
    %83 = vmatprep.subr.bf16.mxu0 0
    %84 = vmatpush2.bf16.msra.mxu0 0
    %85 = vmatprep.subr.bf16.mxu0 0
    %86 = vmatpush2.bf16.msra.mxu0 0
    %87 = vmatprep.subr.bf16.mxu0 0
    %88 = vmatpush2.bf16.msra.mxu0 0
    %89 = vmatprep.subr.bf16.mxu0 0
    %90 = vmatpush2.bf16.msra.mxu0 0
    %91 = vmatprep.mubr.bf16.mxu0 0
    %92 = vmatmul.mubr.bf16.gmra.mxu0 %v57
    %v93 = vpop.f32.mrf.mxu0
    %v94 = vadd.f32 %v41, %v93
    %v95 = vpop.f32.mrf.mxu0
    %v96 = vpop.f32.mrf.mxu0
    %v97 = vadd.f32 %v41, %v96
    %v98 = vpop.f32.mrf.mxu0
    %99 = vdwg.mxu0
    %v100 = vmax.f32 %v94, 0.0
    %v101 = vmax.f32 %v97, 0.0
    %v102 = vld [vmem:[#allocation2] sm:$0xff]
    %v103 = vld [vmem:[#allocation2 + $0x8] sm:$0xff]
    %v104 = vpack.c.bf16 %v101, %v100
    %v105 = vld [vmem:[%s3] sm:$0xf]
    %v106 = vld [vmem:[%s3 + $0x4] sm:$0xf]
    %v107 = vld [vmem:[%s3 + $0x8] sm:$0xf]
    %v108 = vld [vmem:[%s3 + $0xc] sm:$0xf]
    %v109 = vld [vmem:[%s3 + $0x10] sm:$0xf]
    %v110 = vld [vmem:[%s3 + $0x14] sm:$0xf]
    %v111 = vld [vmem:[%s3 + $0x18] sm:$0xf]
    %v112 = vld [vmem:[%s3 + $0x1c] sm:$0xf]
    %v121 = vunpack.c.l.b16 %v105
    %v122 = vunpack.c.l.b16 %v106
    %v123 = vunpack.c.l.b16 %v107
    %v124 = vunpack.c.l.b16 %v108
    %v125 = vunpack.c.l.b16 %v109
    %v126 = vunpack.c.l.b16 %v110
    %v127 = vunpack.c.l.b16 %v111
    %v128 = vunpack.c.l.b16 %v112
    %v129 = vpack.c.b16 %v122, %v121
    %v130 = vpack.c.b16 %v124, %v123
    %v131 = vpack.c.b16 %v126, %v125
    %v132 = vpack.c.b16 %v128, %v127
    %vm137 = vcmask 523264
    %v139 = vsel %vm137, %v104, 0
    %141 = vmatprep.subr.bf16.mxu0 0
    %142 = vmatpush1.bf16.msra.mxu0 0
    %143 = vmatprep.subr.bf16.mxu0 0
    %144 = vmatpush1.bf16.msra.mxu0 0
    %145 = vmatprep.subr.bf16.mxu0 0
    %146 = vmatpush1.bf16.msra.mxu0 0
    %147 = vmatprep.subr.bf16.mxu0 0
    %148 = vmatpush1.bf16.msra.mxu0 0
    %149 = vmatprep.subr.bf16.mxu0 0
    %150 = vmatpush1.bf16.msra.mxu0 %v132
    %151 = vmatprep.subr.bf16.mxu0 0
    %152 = vmatpush1.bf16.msra.mxu0 %v131
    %153 = vmatprep.subr.bf16.mxu0 0
    %154 = vmatpush1.bf16.msra.mxu0 %v130
    %155 = vmatprep.subr.bf16.mxu0 0
    %156 = vmatpush1.bf16.msra.mxu0 %v129
    %157 = vmatprep.subr.bf16.mxu0 0
    %158 = vmatpush2.bf16.msra.mxu0 0
    %159 = vmatprep.subr.bf16.mxu0 0
    %160 = vmatpush2.bf16.msra.mxu0 0
    %161 = vmatprep.subr.bf16.mxu0 0
    %162 = vmatpush2.bf16.msra.mxu0 0
    %163 = vmatprep.subr.bf16.mxu0 0
    %164 = vmatpush2.bf16.msra.mxu0 0
    %165 = vmatprep.subr.bf16.mxu0 0
    %166 = vmatpush2.bf16.msra.mxu0 0
    %167 = vmatprep.subr.bf16.mxu0 0
    %168 = vmatpush2.bf16.msra.mxu0 0
    %169 = vmatprep.subr.bf16.mxu0 0
    %170 = vmatpush2.bf16.msra.mxu0 0
    %171 = vmatprep.subr.bf16.mxu0 0
    %172 = vmatpush2.bf16.msra.mxu0 0
    %173 = vmatprep.mubr.bf16.mxu0 0
    %174 = vmatmul.mubr.bf16.gmra.mxu0 %v139
    %v175 = vpop.f32.mrf.mxu0
    %v176 = vadd.f32 0.0, %v175
    %v177 = vpop.f32.mrf.mxu0
    %v178 = vpop.f32.mrf.mxu0
    %v179 = vadd.f32 0.0, %v178
    %v180 = vpop.f32.mrf.mxu0
    %181 = vdwg.mxu0
    %v182 = vadd.f32 %v102, %v176
    %v183 = vadd.f32 %v103, %v179
    %184 = vst.msk [vmem:[#allocation2] sm:$0xff] %vm55, %v182
    %185 = vst.msk [vmem:[#allocation2 + $0x8] sm:$0xff] %vm55, %v183
    // Predicated region
    $region26: #{tpu_custom_call.1} parent=1 // pred_check
      %p186 = pneg %p22
    $region27: #{tpu_custom_call.1} parent=1 // pred_check_branch
      %188 = sbr.rel (%p186) target = $region29
    $region28: #{tpu_custom_call.1} parent=1 // pred_region
      %v189 = vld [vmem:[#allocation2] sm:$0xff]
      %v190 = vld [vmem:[#allocation2 + $0x8] sm:$0xff]
      %v191 = vld [vmem:[%s4] sm:$0x1]
      %v193 = vlaneseq
      %v194 = vshrl.u32 %v193, 7
      %v195 = vsub.s32 0, %v194
      %v196 = vrot.slane %v191, %v195
      %v198 = vadd.f32 %v189, %v196
      %v199 = vadd.f32 %v190, %v196
      %200 = vst.msk [vmem:[#allocation3] sm:$0xff] %vm55, %v198
      %201 = vst.msk [vmem:[#allocation3 + $0x8] sm:$0xff] %vm55, %v199
    $region29: #{tpu_custom_call.1} parent=1 // pred_fallthru
      _
    // Predicated region
    $region30: #{tpu_custom_call.1} parent=1 // pred_check
      _
    $region31: #{tpu_custom_call.1} parent=1 // pred_check_branch
      %203 = sbr.rel (0) target = $region33
    $region32: #{tpu_custom_call.1} parent=1 // pred_region
      %s205 = ssub.s32 256, 256
      %206 = vsyncadd [#allocation4], %s205
      %s207 = sshll.u32 [#allocation3], 4
      %s208 = int_to_ptr.vmem [resolvable:$true] %s207
      %213 = dma.vmem_to_hbm [thread:$0]  %s208, 256, %s5, [#allocation4], 128, 128, 8
    $region33: #{tpu_custom_call.1} parent=1 // pred_fallthru
      _
    // Predicated region
    $region34: #{tpu_custom_call.1} parent=1 // pred_check
      _
    $region35: #{tpu_custom_call.1} parent=1 // pred_check_branch
      %215 = sbr.rel (0) target = $region37
    $region36: #{tpu_custom_call.1} parent=1 // pred_region
      %216 = dma.done [#allocation4], 256
    $region37: #{tpu_custom_call.1} parent=1 // pred_fallthru
      _
    %217 = vsyncpa [#allocation4], 1

</llo_original>
